<compile_context>
chip_gen: v6e
topology: v6e:2x2x1
jax: 0.10.0
libtpu: 0.0.40
codegen_flags: <defaults>
</compile_context>

<pallas_src>
import functools
import math

import jax
import jax.numpy as jnp
from jax.experimental import pallas as pl
from jax.experimental.pallas import tpu as pltpu


def _softplus(x):
    # Single exp + single log; matches F.softplus(beta=1, threshold=20) to
    # float32 precision for all inputs.
    return jnp.maximum(x, 0.0) + jnp.log(1.0 + jnp.exp(-jnp.abs(x)))


# ---------------------------------------------------------------------------
# Fused kernel: conv1+bn1+softplus -> shortcut -> conv2+bn2+res+softplus
# ---------------------------------------------------------------------------
def _basic_block_kernel(*refs, stride, H, W, Cin, Cout, Ho, Wo, Nb, has_proj):
    """One batch tile (Nb images) per grid step; matmul M = Nb*Ho.

    x_ref:    (Nb*H, W*Cin)          lane-dense input rows (Nb images stacked)
    w1_ref:   (3, W*Cin, Wo*Cout)    structured conv1 weights (BN + stride folded)
    b1_ref:   (1, Wo*Cout)           folded bias (conv1 bias + bn1)
    w2_ref:   (3, Wo*Cout, Wo*Cout)  structured conv2 weights (BN folded)
    b2_ref:   (1, Wo*Cout)           folded bias (conv2 + bn2 [+ shortcut])
    ws_ref:   (W*Cin, Wo*Cout)       structured projection shortcut (optional)
    o_ref:    (Nb*Ho, Wo*Cout)       lane-dense output rows
    xpad_ref: (Nb*(H+2), W*Cin)      VMEM, vertical-halo padded input
    mid_ref:  (Nb*(Ho+2), Wo*Cout)   VMEM, vertical-halo padded conv1 act.
    """
    if has_proj:
        (x_ref, w1_ref, b1_ref, w2_ref, b2_ref, ws_ref,
         o_ref, xpad_ref, mid_ref) = refs
    else:
        (x_ref, w1_ref, b1_ref, w2_ref, b2_ref,
         o_ref, xpad_ref, mid_ref) = refs
        ws_ref = None

    s = stride
    f32 = jnp.float32
    Kin = W * Cin
    No = Wo * Cout
    Hp = H + 2
    Hq = Ho + 2

    # Zero only the halo rows (interiors are fully rewritten every step).
    zx = jnp.zeros((1, Kin), xpad_ref.dtype)
    zm = jnp.zeros((1, No), mid_ref.dtype)
    for n in range(Nb):
        xpad_ref[pl.ds(n * Hp, 1), :] = zx
        xpad_ref[pl.ds(n * Hp + H + 1, 1), :] = zx
        mid_ref[pl.ds(n * Hq, 1), :] = zm
        mid_ref[pl.ds(n * Hq + Ho + 1, 1), :] = zm

    # Lane-aligned interior copies (horizontal padding folded into weights).
    for n in range(Nb):
        xpad_ref[pl.ds(n * Hp + 1, H), :] = x_ref[pl.ds(n * H, H), :]

    def tap1(dy):
        # Padded-input rows {s*oy + dy : oy in [0, Ho)} for every image in the
        # tile, stacked along M -> (Nb*Ho, W*Cin).  Strided sublane loads, no
        # selection matmul.
        parts = []
        for n in range(Nb):
            base = n * Hp + dy
            sl = pl.ds(base, Ho, stride=s) if s > 1 else pl.ds(base, Ho)
            parts.append(xpad_ref[sl, :])
        return parts[0] if Nb == 1 else jnp.concatenate(parts, axis=0)

    rows_c = tap1(1)          # centre-tap rows (input rows s*oy), reused below

    # ---- conv1 (strided, computed directly) + bn1 (scale folded) -----------
    acc1 = jnp.dot(tap1(0), w1_ref[0], preferred_element_type=f32)
    acc1 = acc1 + jnp.dot(rows_c, w1_ref[1], preferred_element_type=f32)
    acc1 = acc1 + jnp.dot(tap1(2), w1_ref[2], preferred_element_type=f32)
    act1 = _softplus(acc1 + b1_ref[...])                   # (Nb*Ho, No), f32

    # ---- shortcut: projection matmul, or the raw centre rows for identity --
    if has_proj:
        sc = jnp.dot(rows_c, ws_ref[...], preferred_element_type=f32)
    else:
        sc = rows_c.astype(f32)

    # ---- conv1 activation stays in VMEM (vertical halo only) ---------------
    for n in range(Nb):
        mid_ref[pl.ds(n * Hq + 1, Ho), :] = (
            act1[n * Ho:(n + 1) * Ho, :].astype(mid_ref.dtype))

    def tap2(dy):
        parts = [mid_ref[pl.ds(n * Hq + dy, Ho), :] for n in range(Nb)]
        return parts[0] if Nb == 1 else jnp.concatenate(parts, axis=0)

    # ---- conv2 (stride 1) + bn2 + residual + softplus -----------------------
    acc2 = sc
    for dy in range(3):
        acc2 = acc2 + jnp.dot(tap2(dy), w2_ref[dy], preferred_element_type=f32)
    o_ref[...] = _softplus(acc2 + b2_ref[...]).astype(o_ref.dtype)


def _pick_batch_tile(N, Ho, target_m=128):
    """Largest divisor of N that brings M = Nb*Ho up to ~target_m."""
    nb = min(N, max(1, -(-target_m // Ho)))
    while N % nb:
        nb -= 1
    return nb


def _build_pallas_call(N, Nb, H, W, Cin, Cout, Ho, Wo, stride, dtype, has_proj):
    No = Wo * Cout
    Kin = W * Cin
    kernel = functools.partial(
        _basic_block_kernel, stride=stride, H=H, W=W, Cin=Cin, Cout=Cout,
        Ho=Ho, Wo=Wo, Nb=Nb, has_proj=has_proj)
    in_specs = [
        pl.BlockSpec((Nb * H, Kin), lambda t: (t, 0)),      # x rows
        pl.BlockSpec((3, Kin, No), lambda t: (0, 0, 0)),    # W1
        pl.BlockSpec((1, No), lambda t: (0, 0)),            # b1
        pl.BlockSpec((3, No, No), lambda t: (0, 0, 0)),     # W2
        pl.BlockSpec((1, No), lambda t: (0, 0)),            # b2
    ]
    if has_proj:
        in_specs.append(pl.BlockSpec((Kin, No), lambda t: (0, 0)))  # Ws
    return pl.pallas_call(
        kernel,
        out_shape=jax.ShapeDtypeStruct((N * Ho, No), dtype),
        grid=(N // Nb,),
        in_specs=in_specs,
        out_specs=pl.BlockSpec((Nb * Ho, No), lambda t: (t, 0)),
        scratch_shapes=[
            pltpu.VMEM((Nb * (H + 2), Kin), dtype),
            pltpu.VMEM((Nb * (Ho + 2), No), jnp.float32),
        ],
        compiler_params=pltpu.CompilerParams(
            dimension_semantics=("parallel",)),
    )


# ---------------------------------------------------------------------------
# Wrapper-time structured-weight construction (stride/taps/BN-scale folded in,
# horizontal zero padding folded in -> unpadded column index iw in [0, W))
# ---------------------------------------------------------------------------
def _conv3x3_struct(w, stride, w_in, wo):
    """w: (3, 3, cin, cout) -> (3, w_in*cin, wo*cout).

    Row (iw*cin + ci), col (ox*cout + co) of slab dy holds w[dy, dx, ci, co]
    with dx = iw - stride*ox + 1 when 0 <= dx < 3, else 0 (iw is an unpadded
    input column; out-of-range taps are the folded horizontal zero padding).
    """
    kh, kw, cin, cout = w.shape
    iw = jnp.arange(w_in)[:, None]
    ox = jnp.arange(wo)[None, :]
    dx = iw - stride * ox + 1                               # (w_in, wo)
    valid = ((dx >= 0) & (dx < kw)).astype(w.dtype)
    dxc = jnp.clip(dx, 0, kw - 1)
    wd = w[:, dxc, :, :]                                    # (3, w_in, wo, cin, cout)
    wd = wd * valid[None, :, :, None, None]
    wd = wd.transpose(0, 1, 3, 2, 4).reshape(kh, w_in * cin, wo * cout)
    return wd


def _shortcut_struct(ws, stride, w_in, wo):
    """ws: (cin, cout) 1x1 conv -> (w_in*cin, wo*cout), unpadded columns."""
    cin, cout = ws.shape
    iw = jnp.arange(w_in)[:, None]
    ox = jnp.arange(wo)[None, :]
    hit = (iw == stride * ox).astype(ws.dtype)              # (w_in, wo)
    full = hit[:, :, None, None] * ws[None, None, :, :]     # (w_in, wo, cin, cout)
    return full.transpose(0, 2, 1, 3).reshape(w_in * cin, wo * cout)


def prepare_basic_block(params, stride, H, W):
    """Build structured weights / folded biases ONCE, outside the hot path."""
    Cout = params["w1"].shape[-1]
    Wo = (W - 1) // stride + 1
    w1f = params["w1"] * params["scale1"]                   # fold BN1 scale
    w2f = params["w2"] * params["scale2"]                   # fold BN2 scale
    prep = dict(
        W1=_conv3x3_struct(w1f, stride, W, Wo),             # (3, W*Cin,  Wo*Cout)
        W2=_conv3x3_struct(w2f, 1, Wo, Wo),                 # (3, Wo*Cout, Wo*Cout)
        b1=jnp.tile(params["bias1"], Wo)[None, :],          # (1, Wo*Cout)
    )
    if "ws" in params:                                      # projection shortcut
        wsf = params["ws"] * params["scale_s"]
        prep["Ws"] = _shortcut_struct(wsf, stride, W, Wo)
        prep["b2"] = jnp.tile(params["bias2"] + params["bias_s"], Wo)[None, :]
    else:                                                   # identity shortcut
        prep["b2"] = jnp.tile(params["bias2"], Wo)[None, :]
    return prep


# ---------------------------------------------------------------------------
# basic_block forward (layout glue in plain JAX; everything hot in one kernel)
# ---------------------------------------------------------------------------
def basic_block_forward(x_nchw, prepared, stride):
    N, Cin, H, W = x_nchw.shape
    Ho = (H - 1) // stride + 1
    Wo = (W - 1) // stride + 1
    No = prepared["W2"].shape[-1]
    Cout = No // Wo
    has_proj = "Ws" in prepared
    if not has_proj:
        assert stride == 1 and Cin == Cout, "identity shortcut shape mismatch"

    # NCHW -> lane-dense (N*H, W*Cin) row slab.
    x = jnp.transpose(x_nchw, (0, 2, 3, 1)).reshape(N * H, W * Cin)

    Nb = _pick_batch_tile(N, Ho)
    call = _build_pallas_call(N, Nb, H, W, Cin, Cout, Ho, Wo, stride,
                              x.dtype, has_proj)
    args = [x, prepared["W1"], prepared["b1"], prepared["W2"], prepared["b2"]]
    if has_proj:
        args.append(prepared["Ws"])
    out = call(*args)                                       # (N*Ho, Wo*Cout)
    out = out.reshape(N, Ho, Wo, Cout)
    return jnp.transpose(out, (0, 3, 1, 2))                 # back to NCHW


# ---------------------------------------------------------------------------
# Deterministic parameter init (mirrors nn.Conv2d / nn.BatchNorm2d defaults)
# ---------------------------------------------------------------------------
def init_basic_block(key, in_planes, out_planes, stride, eps=1e-5):
    ks = jax.random.split(key, 3)

    def conv_init(k, kh, kw, cin, cout):
        k1, k2 = jax.random.split(k)
        bound = 1.0 / math.sqrt(cin * kh * kw)
        w = jax.random.uniform(k1, (kh, kw, cin, cout), jnp.float32,
                               -bound, bound)
        b = jax.random.uniform(k2, (cout,), jnp.float32, -bound, bound)
        return w, b

    def bn_fold(conv_b, cout):
        gamma = jnp.ones((cout,), jnp.float32)
        beta = jnp.zeros((cout,), jnp.float32)
        running_mean = jnp.zeros((cout,), jnp.float32)
        running_var = jnp.ones((cout,), jnp.float32)
        scale = gamma / jnp.sqrt(running_var + eps)
        bias = (conv_b - running_mean) * scale + beta
        return scale, bias

    w1, b1 = conv_init(ks[0], 3, 3, in_planes, out_planes)
    scale1, bias1 = bn_fold(b1, out_planes)
    w2, b2 = conv_init(ks[1], 3, 3, out_planes, out_planes)
    scale2, bias2 = bn_fold(b2, out_planes)
    params = dict(w1=w1, scale1=scale1, bias1=bias1,
                  w2=w2, scale2=scale2, bias2=bias2)
    if stride != 1 or in_planes != out_planes:
        ws, bs = conv_init(ks[2], 1, 1, in_planes, out_planes)
        scale_s, bias_s = bn_fold(bs, out_planes)
        params.update(ws=ws.reshape(in_planes, out_planes),
                      scale_s=scale_s, bias_s=bias_s)
    return params


# ---------------------------------------------------------------------------
# Pure-JAX reference (eval-mode BN) for correctness checking
# ---------------------------------------------------------------------------
def _reference_forward(x, params, stride):
    def conv(v, w, s, pad):
        return jax.lax.conv_general_dilated(
            v, w, window_strides=(s, s), padding=pad,
            dimension_numbers=("NCHW", "HWIO", "NCHW"),
            precision=jax.lax.Precision.HIGHEST)

    def affine(v, scale, bias):
        return v * scale[None, :, None, None] + bias[None, :, None, None]

    sp = lambda v: jnp.maximum(v, 0.0) + jnp.log1p(jnp.exp(-jnp.abs(v)))

    out = sp(affine(conv(x, params["w1"], stride, [(1, 1), (1, 1)]),
                    params["scale1"], params["bias1"]))
    out = affine(conv(out, params["w2"], 1, [(1, 1), (1, 1)]),
                 params["scale2"], params["bias2"])
    if "ws" in params:
        cin, cout = params["ws"].shape
        sc = affine(conv(x, params["ws"].reshape(1, 1, cin, cout), stride,
                         [(0, 0), (0, 0)]),
                    params["scale_s"], params["bias_s"])
    else:
        sc = x
    return sp(out + sc)


if __name__ == "__main__":
    key = jax.random.PRNGKey(0)
    k_x, k_p1, k_p2 = jax.random.split(key, 3)

    forward = jax.jit(basic_block_forward, static_argnames=("stride",))

    # Downsampling block: in_planes=4 -> out_planes=8, stride=2 (projection).
    N, Cin, H, W = 2, 4, 16, 16
    Cout, stride = 8, 2
    x = jax.random.normal(k_x, (N, Cin, H, W), jnp.float32)
    params = init_basic_block(k_p1, Cin, Cout, stride)
    prepared = prepare_basic_block(params, stride, H, W)     # once, offline
    out = forward(x, prepared, stride=stride)
    jax.block_until_ready(out)
    Ho = (H - 1) // stride + 1
    assert out.shape == (N, Cout, Ho, Ho), out.shape
    ref = _reference_forward(x, params, stride)
    assert bool(jnp.allclose(out, ref, rtol=2e-5, atol=2e-5)), \
        float(jnp.max(jnp.abs(out - ref)))

    # Identity-shortcut block: in_planes == out_planes, stride=1.
    params_id = init_basic_block(k_p2, Cin, Cin, 1)
    prepared_id = prepare_basic_block(params_id, 1, H, W)
    out_id = forward(x, prepared_id, stride=1)
    jax.block_until_ready(out_id)
    assert out_id.shape == (N, Cin, H, W), out_id.shape
    ref_id = _reference_forward(x, params_id, 1)
    assert bool(jnp.allclose(out_id, ref_id, rtol=2e-5, atol=2e-5)), \
        float(jnp.max(jnp.abs(out_id - ref_id)))

    print("KERNEL_OK")
</pallas_src>

<mosaic_0001>
module attributes {stable_mosaic.version = 11 : i64} {
  func.func @_basic_block_kernel(%arg0: i32, %arg1: memref<32x64xf32, #tpu.memory_space<vmem>>, %arg2: memref<3x64x64xf32, #tpu.memory_space<vmem>>, %arg3: memref<1x64xf32, #tpu.memory_space<vmem>>, %arg4: memref<3x64x64xf32, #tpu.memory_space<vmem>>, %arg5: memref<1x64xf32, #tpu.memory_space<vmem>>, %arg6: memref<64x64xf32, #tpu.memory_space<vmem>>, %arg7: memref<16x64xf32, #tpu.memory_space<vmem>>, %arg8: memref<36x64xf32, #tpu.memory_space<vmem>>, %arg9: memref<20x64xf32, #tpu.memory_space<vmem>>) attributes {dimension_semantics = [#tpu.dimension_semantics<parallel>], iteration_bounds = array<i64: 1>, scalar_prefetch = 0 : i64, scratch_operands = 2 : i64, tpu.core_type = #tpu.core_type<tc>, window_params = [{transform_indices = @transform_0, window_bounds = array<i64: 32, 64>}, {pipeline_mode = #tpu.pipeline_mode<synchronous>, transform_indices = @transform_1, window_bounds = array<i64: 3, 64, 64>}, {pipeline_mode = #tpu.pipeline_mode<synchronous>, transform_indices = @transform_2, window_bounds = array<i64: 1, 64>}, {pipeline_mode = #tpu.pipeline_mode<synchronous>, transform_indices = @transform_3, window_bounds = array<i64: 3, 64, 64>}, {pipeline_mode = #tpu.pipeline_mode<synchronous>, transform_indices = @transform_4, window_bounds = array<i64: 1, 64>}, {pipeline_mode = #tpu.pipeline_mode<synchronous>, transform_indices = @transform_5, window_bounds = array<i64: 64, 64>}, {transform_indices = @transform_6, window_bounds = array<i64: 16, 64>}]} {
    %cst = arith.constant 0.000000e+00 : f32
    %0 = vector.broadcast %cst : f32 to vector<1x64xf32>
    %cst_0 = arith.constant 0.000000e+00 : f32
    %1 = vector.broadcast %cst_0 : f32 to vector<1x64xf32>
    %c0 = arith.constant 0 : index
    %c0_1 = arith.constant 0 : index
    %2 = vector.load %arg8[%c0, %c0_1] : memref<36x64xf32, #tpu.memory_space<vmem>>, vector<1x64xf32>
    tpu.vector_store %arg8[%c0, %c0_1], %0 {strides = array<i32>} : memref<36x64xf32, #tpu.memory_space<vmem>>, vector<1x64xf32>,
    %c17 = arith.constant 17 : index
    %c0_2 = arith.constant 0 : index
    %3 = vector.load %arg8[%c17, %c0_2] : memref<36x64xf32, #tpu.memory_space<vmem>>, vector<1x64xf32>
    tpu.vector_store %arg8[%c17, %c0_2], %0 {strides = array<i32>} : memref<36x64xf32, #tpu.memory_space<vmem>>, vector<1x64xf32>,
    %c0_3 = arith.constant 0 : index
    %c0_4 = arith.constant 0 : index
    %4 = vector.load %arg9[%c0_3, %c0_4] : memref<20x64xf32, #tpu.memory_space<vmem>>, vector<1x64xf32>
    tpu.vector_store %arg9[%c0_3, %c0_4], %1 {strides = array<i32>} : memref<20x64xf32, #tpu.memory_space<vmem>>, vector<1x64xf32>,
    %c9 = arith.constant 9 : index
    %c0_5 = arith.constant 0 : index
    %5 = vector.load %arg9[%c9, %c0_5] : memref<20x64xf32, #tpu.memory_space<vmem>>, vector<1x64xf32>
    tpu.vector_store %arg9[%c9, %c0_5], %1 {strides = array<i32>} : memref<20x64xf32, #tpu.memory_space<vmem>>, vector<1x64xf32>,
    %c18 = arith.constant 18 : index
    %c0_6 = arith.constant 0 : index
    %6 = vector.load %arg8[%c18, %c0_6] : memref<36x64xf32, #tpu.memory_space<vmem>>, vector<1x64xf32>
    tpu.vector_store %arg8[%c18, %c0_6], %0 {strides = array<i32>} : memref<36x64xf32, #tpu.memory_space<vmem>>, vector<1x64xf32>,
    %c35 = arith.constant 35 : index
    %c0_7 = arith.constant 0 : index
    %7 = vector.load %arg8[%c35, %c0_7] : memref<36x64xf32, #tpu.memory_space<vmem>>, vector<1x64xf32>
    tpu.vector_store %arg8[%c35, %c0_7], %0 {strides = array<i32>} : memref<36x64xf32, #tpu.memory_space<vmem>>, vector<1x64xf32>,
    %c10 = arith.constant 10 : index
    %c0_8 = arith.constant 0 : index
    %8 = vector.load %arg9[%c10, %c0_8] : memref<20x64xf32, #tpu.memory_space<vmem>>, vector<1x64xf32>
    tpu.vector_store %arg9[%c10, %c0_8], %1 {strides = array<i32>} : memref<20x64xf32, #tpu.memory_space<vmem>>, vector<1x64xf32>,
    %c19 = arith.constant 19 : index
    %c0_9 = arith.constant 0 : index
    %9 = vector.load %arg9[%c19, %c0_9] : memref<20x64xf32, #tpu.memory_space<vmem>>, vector<1x64xf32>
    tpu.vector_store %arg9[%c19, %c0_9], %1 {strides = array<i32>} : memref<20x64xf32, #tpu.memory_space<vmem>>, vector<1x64xf32>,
    %c0_10 = arith.constant 0 : index
    %c0_11 = arith.constant 0 : index
    %10 = vector.load %arg1[%c0_10, %c0_11] : memref<32x64xf32, #tpu.memory_space<vmem>>, vector<16x64xf32>
    %c1 = arith.constant 1 : index
    %c0_12 = arith.constant 0 : index
    %11 = vector.load %arg8[%c1, %c0_12] : memref<36x64xf32, #tpu.memory_space<vmem>>, vector<16x64xf32>
    tpu.vector_store %arg8[%c1, %c0_12], %10 {strides = array<i32>} : memref<36x64xf32, #tpu.memory_space<vmem>>, vector<16x64xf32>,
    %c16 = arith.constant 16 : index
    %c0_13 = arith.constant 0 : index
    %12 = vector.load %arg1[%c16, %c0_13] : memref<32x64xf32, #tpu.memory_space<vmem>>, vector<16x64xf32>
    %c19_14 = arith.constant 19 : index
    %c0_15 = arith.constant 0 : index
    %13 = vector.load %arg8[%c19_14, %c0_15] : memref<36x64xf32, #tpu.memory_space<vmem>>, vector<16x64xf32>
    tpu.vector_store %arg8[%c19_14, %c0_15], %12 {strides = array<i32>} : memref<36x64xf32, #tpu.memory_space<vmem>>, vector<16x64xf32>,
    %c1_16 = arith.constant 1 : index
    %c0_17 = arith.constant 0 : index
    %14 = tpu.strided_load %arg8[%c1_16, %c0_17] {strides = array<i32: 2, 1>} : memref<36x64xf32, #tpu.memory_space<vmem>>, vector<8x64xf32>
    %c19_18 = arith.constant 19 : index
    %c0_19 = arith.constant 0 : index
    %15 = tpu.strided_load %arg8[%c19_18, %c0_19] {strides = array<i32: 2, 1>} : memref<36x64xf32, #tpu.memory_space<vmem>>, vector<8x64xf32>
    %16 = tpu.concatenate %14, %15 in 0 : vector<8x64xf32>, vector<8x64xf32> -> vector<16x64xf32>
    %c0_20 = arith.constant 0 : index
    %c0_21 = arith.constant 0 : index
    %17 = tpu.strided_load %arg8[%c0_20, %c0_21] {strides = array<i32: 2, 1>} : memref<36x64xf32, #tpu.memory_space<vmem>>, vector<8x64xf32>
    %c18_22 = arith.constant 18 : index
    %c0_23 = arith.constant 0 : index
    %18 = tpu.strided_load %arg8[%c18_22, %c0_23] {strides = array<i32: 2, 1>} : memref<36x64xf32, #tpu.memory_space<vmem>>, vector<8x64xf32>
    %19 = tpu.concatenate %17, %18 in 0 : vector<8x64xf32>, vector<8x64xf32> -> vector<16x64xf32>
    %c0_24 = arith.constant 0 : index
    %c0_25 = arith.constant 0 : index
    %c0_26 = arith.constant 0 : index
    %20 = vector.load %arg2[%c0_24, %c0_25, %c0_26] : memref<3x64x64xf32, #tpu.memory_space<vmem>>, vector<1x64x64xf32>
    %21 = vector.shape_cast %20 : vector<1x64x64xf32> to vector<64x64xf32>
    %cst_27 = arith.constant dense<0.000000e+00> : vector<16x64xf32>
    %22 = tpu.matmul %19, %21, %cst_27 {dimension_numbers = #tpu.dot_dimension_numbers<[1], [0], [0], [1], [0, 0, 1, 1], [], []>} : vector<16x64xf32>, vector<64x64xf32>, vector<16x64xf32> -> vector<16x64xf32>
    %c1_28 = arith.constant 1 : index
    %c0_29 = arith.constant 0 : index
    %c0_30 = arith.constant 0 : index
    %23 = vector.load %arg2[%c1_28, %c0_29, %c0_30] : memref<3x64x64xf32, #tpu.memory_space<vmem>>, vector<1x64x64xf32>
    %24 = vector.shape_cast %23 : vector<1x64x64xf32> to vector<64x64xf32>
    %cst_31 = arith.constant dense<0.000000e+00> : vector<16x64xf32>
    %25 = tpu.matmul %16, %24, %cst_31 {dimension_numbers = #tpu.dot_dimension_numbers<[1], [0], [0], [1], [0, 0, 1, 1], [], []>} : vector<16x64xf32>, vector<64x64xf32>, vector<16x64xf32> -> vector<16x64xf32>
    %26 = arith.addf %22, %25 : vector<16x64xf32>
    %c2 = arith.constant 2 : index
    %c0_32 = arith.constant 0 : index
    %27 = tpu.strided_load %arg8[%c2, %c0_32] {strides = array<i32: 2, 1>} : memref<36x64xf32, #tpu.memory_space<vmem>>, vector<8x64xf32>
    %c20 = arith.constant 20 : index
    %c0_33 = arith.constant 0 : index
    %28 = tpu.strided_load %arg8[%c20, %c0_33] {strides = array<i32: 2, 1>} : memref<36x64xf32, #tpu.memory_space<vmem>>, vector<8x64xf32>
    %29 = tpu.concatenate %27, %28 in 0 : vector<8x64xf32>, vector<8x64xf32> -> vector<16x64xf32>
    %c2_34 = arith.constant 2 : index
    %c0_35 = arith.constant 0 : index
    %c0_36 = arith.constant 0 : index
    %30 = vector.load %arg2[%c2_34, %c0_35, %c0_36] : memref<3x64x64xf32, #tpu.memory_space<vmem>>, vector<1x64x64xf32>
    %31 = vector.shape_cast %30 : vector<1x64x64xf32> to vector<64x64xf32>
    %cst_37 = arith.constant dense<0.000000e+00> : vector<16x64xf32>
    %32 = tpu.matmul %29, %31, %cst_37 {dimension_numbers = #tpu.dot_dimension_numbers<[1], [0], [0], [1], [0, 0, 1, 1], [], []>} : vector<16x64xf32>, vector<64x64xf32>, vector<16x64xf32> -> vector<16x64xf32>
    %33 = arith.addf %26, %32 : vector<16x64xf32>
    %c0_38 = arith.constant 0 : index
    %c0_39 = arith.constant 0 : index
    %34 = vector.load %arg3[%c0_38, %c0_39] : memref<1x64xf32, #tpu.memory_space<vmem>>, vector<1x64xf32>
    %35 = vector.broadcast %34 : vector<1x64xf32> to vector<16x64xf32>
    %36 = arith.addf %33, %35 : vector<16x64xf32>
    %cst_40 = arith.constant 0.000000e+00 : f32
    %37 = vector.broadcast %cst_40 : f32 to vector<16x64xf32>
    %38 = arith.maximumf %36, %37 : vector<16x64xf32>
    %39 = math.absf %36 : vector<16x64xf32>
    %cst_41 = arith.constant 0.000000e+00 : f32
    %40 = vector.broadcast %cst_41 : f32 to vector<16x64xf32>
    %41 = arith.subf %40, %39 : vector<16x64xf32>
    %42 = math.exp %41 : vector<16x64xf32>
    %cst_42 = arith.constant 1.000000e+00 : f32
    %43 = vector.broadcast %cst_42 : f32 to vector<16x64xf32>
    %44 = arith.addf %43, %42 : vector<16x64xf32>
    %45 = math.log %44 : vector<16x64xf32>
    %46 = arith.addf %38, %45 : vector<16x64xf32>
    %c0_43 = arith.constant 0 : index
    %c0_44 = arith.constant 0 : index
    %47 = vector.load %arg6[%c0_43, %c0_44] : memref<64x64xf32, #tpu.memory_space<vmem>>, vector<64x64xf32>
    %cst_45 = arith.constant dense<0.000000e+00> : vector<16x64xf32>
    %48 = tpu.matmul %16, %47, %cst_45 {dimension_numbers = #tpu.dot_dimension_numbers<[1], [0], [0], [1], [0, 0, 1, 1], [], []>} : vector<16x64xf32>, vector<64x64xf32>, vector<16x64xf32> -> vector<16x64xf32>
    %49 = vector.extract_strided_slice %46 {offsets = [0, 0], sizes = [8, 64], strides = [1, 1]} : vector<16x64xf32> to vector<8x64xf32>
    %c1_46 = arith.constant 1 : index
    %c0_47 = arith.constant 0 : index
    %50 = vector.load %arg9[%c1_46, %c0_47] : memref<20x64xf32, #tpu.memory_space<vmem>>, vector<8x64xf32>
    tpu.vector_store %arg9[%c1_46, %c0_47], %49 {strides = array<i32>} : memref<20x64xf32, #tpu.memory_space<vmem>>, vector<8x64xf32>,
    %51 = vector.extract_strided_slice %46 {offsets = [8, 0], sizes = [8, 64], strides = [1, 1]} : vector<16x64xf32> to vector<8x64xf32>
    %c11 = arith.constant 11 : index
    %c0_48 = arith.constant 0 : index
    %52 = vector.load %arg9[%c11, %c0_48] : memref<20x64xf32, #tpu.memory_space<vmem>>, vector<8x64xf32>
    tpu.vector_store %arg9[%c11, %c0_48], %51 {strides = array<i32>} : memref<20x64xf32, #tpu.memory_space<vmem>>, vector<8x64xf32>,
    %c0_49 = arith.constant 0 : index
    %c0_50 = arith.constant 0 : index
    %53 = vector.load %arg9[%c0_49, %c0_50] : memref<20x64xf32, #tpu.memory_space<vmem>>, vector<8x64xf32>
    %c10_51 = arith.constant 10 : index
    %c0_52 = arith.constant 0 : index
    %54 = vector.load %arg9[%c10_51, %c0_52] : memref<20x64xf32, #tpu.memory_space<vmem>>, vector<8x64xf32>
    %55 = tpu.concatenate %53, %54 in 0 : vector<8x64xf32>, vector<8x64xf32> -> vector<16x64xf32>
    %c0_53 = arith.constant 0 : index
    %c0_54 = arith.constant 0 : index
    %c0_55 = arith.constant 0 : index
    %56 = vector.load %arg4[%c0_53, %c0_54, %c0_55] : memref<3x64x64xf32, #tpu.memory_space<vmem>>, vector<1x64x64xf32>
    %57 = vector.shape_cast %56 : vector<1x64x64xf32> to vector<64x64xf32>
    %cst_56 = arith.constant dense<0.000000e+00> : vector<16x64xf32>
    %58 = tpu.matmul %55, %57, %cst_56 {dimension_numbers = #tpu.dot_dimension_numbers<[1], [0], [0], [1], [0, 0, 1, 1], [], []>} : vector<16x64xf32>, vector<64x64xf32>, vector<16x64xf32> -> vector<16x64xf32>
    %59 = arith.addf %48, %58 : vector<16x64xf32>
    %c1_57 = arith.constant 1 : index
    %c0_58 = arith.constant 0 : index
    %60 = vector.load %arg9[%c1_57, %c0_58] : memref<20x64xf32, #tpu.memory_space<vmem>>, vector<8x64xf32>
    %c11_59 = arith.constant 11 : index
    %c0_60 = arith.constant 0 : index
    %61 = vector.load %arg9[%c11_59, %c0_60] : memref<20x64xf32, #tpu.memory_space<vmem>>, vector<8x64xf32>
    %62 = tpu.concatenate %60, %61 in 0 : vector<8x64xf32>, vector<8x64xf32> -> vector<16x64xf32>
    %c1_61 = arith.constant 1 : index
    %c0_62 = arith.constant 0 : index
    %c0_63 = arith.constant 0 : index
    %63 = vector.load %arg4[%c1_61, %c0_62, %c0_63] : memref<3x64x64xf32, #tpu.memory_space<vmem>>, vector<1x64x64xf32>
    %64 = vector.shape_cast %63 : vector<1x64x64xf32> to vector<64x64xf32>
    %cst_64 = arith.constant dense<0.000000e+00> : vector<16x64xf32>
    %65 = tpu.matmul %62, %64, %cst_64 {dimension_numbers = #tpu.dot_dimension_numbers<[1], [0], [0], [1], [0, 0, 1, 1], [], []>} : vector<16x64xf32>, vector<64x64xf32>, vector<16x64xf32> -> vector<16x64xf32>
    %66 = arith.addf %59, %65 : vector<16x64xf32>
    %c2_65 = arith.constant 2 : index
    %c0_66 = arith.constant 0 : index
    %67 = vector.load %arg9[%c2_65, %c0_66] : memref<20x64xf32, #tpu.memory_space<vmem>>, vector<8x64xf32>
    %c12 = arith.constant 12 : index
    %c0_67 = arith.constant 0 : index
    %68 = vector.load %arg9[%c12, %c0_67] : memref<20x64xf32, #tpu.memory_space<vmem>>, vector<8x64xf32>
    %69 = tpu.concatenate %67, %68 in 0 : vector<8x64xf32>, vector<8x64xf32> -> vector<16x64xf32>
    %c2_68 = arith.constant 2 : index
    %c0_69 = arith.constant 0 : index
    %c0_70 = arith.constant 0 : index
    %70 = vector.load %arg4[%c2_68, %c0_69, %c0_70] : memref<3x64x64xf32, #tpu.memory_space<vmem>>, vector<1x64x64xf32>
    %71 = vector.shape_cast %70 : vector<1x64x64xf32> to vector<64x64xf32>
    %cst_71 = arith.constant dense<0.000000e+00> : vector<16x64xf32>
    %72 = tpu.matmul %69, %71, %cst_71 {dimension_numbers = #tpu.dot_dimension_numbers<[1], [0], [0], [1], [0, 0, 1, 1], [], []>} : vector<16x64xf32>, vector<64x64xf32>, vector<16x64xf32> -> vector<16x64xf32>
    %73 = arith.addf %66, %72 : vector<16x64xf32>
    %c0_72 = arith.constant 0 : index
    %c0_73 = arith.constant 0 : index
    %74 = vector.load %arg5[%c0_72, %c0_73] : memref<1x64xf32, #tpu.memory_space<vmem>>, vector<1x64xf32>
    %75 = vector.broadcast %74 : vector<1x64xf32> to vector<16x64xf32>
    %76 = arith.addf %73, %75 : vector<16x64xf32>
    %cst_74 = arith.constant 0.000000e+00 : f32
    %77 = vector.broadcast %cst_74 : f32 to vector<16x64xf32>
    %78 = arith.maximumf %76, %77 : vector<16x64xf32>
    %79 = math.absf %76 : vector<16x64xf32>
    %cst_75 = arith.constant 0.000000e+00 : f32
    %80 = vector.broadcast %cst_75 : f32 to vector<16x64xf32>
    %81 = arith.subf %80, %79 : vector<16x64xf32>
    %82 = math.exp %81 : vector<16x64xf32>
    %cst_76 = arith.constant 1.000000e+00 : f32
    %83 = vector.broadcast %cst_76 : f32 to vector<16x64xf32>
    %84 = arith.addf %83, %82 : vector<16x64xf32>
    %85 = math.log %84 : vector<16x64xf32>
    %86 = arith.addf %78, %85 : vector<16x64xf32>
    %c0_77 = arith.constant 0 : index
    %c0_78 = arith.constant 0 : index
    %87 = vector.load %arg7[%c0_77, %c0_78] : memref<16x64xf32, #tpu.memory_space<vmem>>, vector<16x64xf32>
    tpu.vector_store %arg7[%c0_77, %c0_78], %86 {strides = array<i32>} : memref<16x64xf32, #tpu.memory_space<vmem>>, vector<16x64xf32>,
    return
  }
  func.func @transform_0(%arg0: i32) -> (i32, i32) {
    %c0_i32 = arith.constant 0 : i32
    %c0_i32_0 = arith.constant 0 : i32
    return %arg0, %c0_i32 : i32, i32
  }
  func.func @transform_1(%arg0: i32) -> (i32, i32, i32) {
    %c0_i32 = arith.constant 0 : i32
    %c0_i32_0 = arith.constant 0 : i32
    %c0_i32_1 = arith.constant 0 : i32
    %c0_i32_2 = arith.constant 0 : i32
    return %c0_i32, %c0_i32_0, %c0_i32_1 : i32, i32, i32
  }
  func.func @transform_2(%arg0: i32) -> (i32, i32) {
    %c0_i32 = arith.constant 0 : i32
    %c0_i32_0 = arith.constant 0 : i32
    %c0_i32_1 = arith.constant 0 : i32
    return %c0_i32, %c0_i32_0 : i32, i32
  }
  func.func @transform_3(%arg0: i32) -> (i32, i32, i32) {
    %c0_i32 = arith.constant 0 : i32
    %c0_i32_0 = arith.constant 0 : i32
    %c0_i32_1 = arith.constant 0 : i32
    %c0_i32_2 = arith.constant 0 : i32
    return %c0_i32, %c0_i32_0, %c0_i32_1 : i32, i32, i32
  }
  func.func @transform_4(%arg0: i32) -> (i32, i32) {
    %c0_i32 = arith.constant 0 : i32
    %c0_i32_0 = arith.constant 0 : i32
    %c0_i32_1 = arith.constant 0 : i32
    return %c0_i32, %c0_i32_0 : i32, i32
  }
  func.func @transform_5(%arg0: i32) -> (i32, i32) {
    %c0_i32 = arith.constant 0 : i32
    %c0_i32_0 = arith.constant 0 : i32
    %c0_i32_1 = arith.constant 0 : i32
    return %c0_i32, %c0_i32_0 : i32, i32
  }
  func.func @transform_6(%arg0: i32) -> (i32, i32) {
    %c0_i32 = arith.constant 0 : i32
    %c0_i32_0 = arith.constant 0 : i32
    return %arg0, %c0_i32 : i32, i32
  }
}

</mosaic_0001>

<llo_original>
// kernel: basic_block_forward.1
$region0: #{basic_block_forward.1}
  #allocation0 [shape = 'u32[]', space=smem, size = 0x4, offset = 0x4, fixed_abs, tag = 'smem constant byte address 0x4 - core index']
  #allocation1 [shape = 'u32[144,128]{1,0:T(1,128)}', space=vmem, size = 0x12000, scoped, tag = 'internal scratch']
  #allocation2 [shape = 'f32[36,64]{1,0:T(8,128)}', space=vmem, size = 0x5000, scoped, tag = 'scratch operand']
  #allocation3 [shape = 'f32[20,64]{1,0:T(8,128)}', space=vmem, size = 0x3000, scoped, tag = 'scratch operand']
  %s0 = inlined_call_operand.vmem [shape: f32[32,64], index: 0, kind: input, shape index: {}]
  %s1 = inlined_call_operand.vmem [shape: f32[3,64,64], index: 1, kind: input, shape index: {}]
  %s2 = inlined_call_operand.vmem [shape: f32[1,64], index: 2, kind: input, shape index: {}]
  %s3 = inlined_call_operand.vmem [shape: f32[3,64,64], index: 3, kind: input, shape index: {}]
  %s4 = inlined_call_operand.vmem [shape: f32[1,64], index: 4, kind: input, shape index: {}]
  %s5 = inlined_call_operand.vmem [shape: f32[64,64], index: 5, kind: input, shape index: {}]
  %s6 = inlined_call_operand.vmem [shape: f32[16,64], index: 6, kind: output, shape index: {}]
  %s7 = sld [smem:[#allocation0]]
  $region34: #{basic_block_forward.1} parent=0
    _
  %s9 = ssub.s32 1, %s7
  %s10 = scalar_select 0, %s9, %s7
  // Predicated region
  $region2: #{basic_block_forward.1} parent=0 // pred_check
    _
  $region3: #{basic_block_forward.1} parent=0 // pred_check_branch
    %12 = sbr.rel (0) target = $region5
  $region4: #{basic_block_forward.1} parent=0 // pred_region
    _
  $region5: #{basic_block_forward.1} parent=0 // pred_fallthru
    _
  // Predicated region
  $region6: #{basic_block_forward.1} parent=0 // pred_check
    _
  $region7: #{basic_block_forward.1} parent=0 // pred_check_branch
    %14 = sbr.rel (0) target = $region9
  $region8: #{basic_block_forward.1} parent=0 // pred_region
    _
  $region9: #{basic_block_forward.1} parent=0 // pred_fallthru
    _
  // Predicated region
  $region10: #{basic_block_forward.1} parent=0 // pred_check
    _
  $region11: #{basic_block_forward.1} parent=0 // pred_check_branch
    %16 = sbr.rel (0) target = $region13
  $region12: #{basic_block_forward.1} parent=0 // pred_region
    _
  $region13: #{basic_block_forward.1} parent=0 // pred_fallthru
    _
  // Predicated region
  $region14: #{basic_block_forward.1} parent=0 // pred_check
    _
  $region15: #{basic_block_forward.1} parent=0 // pred_check_branch
    %18 = sbr.rel (0) target = $region17
  $region16: #{basic_block_forward.1} parent=0 // pred_region
    _
  $region17: #{basic_block_forward.1} parent=0 // pred_fallthru
    _
  // Predicated region
  $region18: #{basic_block_forward.1} parent=0 // pred_check
    _
  $region19: #{basic_block_forward.1} parent=0 // pred_check_branch
    %20 = sbr.rel (0) target = $region21
  $region20: #{basic_block_forward.1} parent=0 // pred_region
    _
  $region21: #{basic_block_forward.1} parent=0 // pred_fallthru
    _
  // Predicated region
  $region22: #{basic_block_forward.1} parent=0 // pred_check
    _
  $region23: #{basic_block_forward.1} parent=0 // pred_check_branch
    %22 = sbr.rel (0) target = $region25
  $region24: #{basic_block_forward.1} parent=0 // pred_region
    _
  $region25: #{basic_block_forward.1} parent=0 // pred_fallthru
    _
  %vm23 = vcmask 516096
  %24 = vst.msk [vmem:[#allocation2] sm:$0x1] %vm23, 0.0
  %25 = vst.msk [vmem:[#allocation2 + $0x11] sm:$0x1] %vm23, 0.0
  %26 = vst.msk [vmem:[#allocation3] sm:$0x1] %vm23, 0.0
  %27 = vst.msk [vmem:[#allocation3 + $0x9] sm:$0x1] %vm23, 0.0
  %28 = vst.msk [vmem:[#allocation2 + $0x12] sm:$0x1] %vm23, 0.0
  %29 = vst.msk [vmem:[#allocation2 + $0x23] sm:$0x1] %vm23, 0.0
  %30 = vst.msk [vmem:[#allocation3 + $0xa] sm:$0x1] %vm23, 0.0
  %31 = vst.msk [vmem:[#allocation3 + $0x13] sm:$0x1] %vm23, 0.0
  %v32 = vld [vmem:[%s0] sm:$0xff]
  %v33 = vld [vmem:[%s0 + $0x8] sm:$0xff]
  %vm34 = vcmask 523264
  %35 = vst.msk [vmem:[#allocation2 + $0x1] sm:$0xff] %vm34, %v32
  %36 = vst.msk [vmem:[#allocation2 + $0x9] sm:$0xff] %vm34, %v33
  %v37 = vld [vmem:[%s0 + $0x10] sm:$0xff]
  %v38 = vld [vmem:[%s0 + $0x18] sm:$0xff]
  %39 = vst.msk [vmem:[#allocation2 + $0x13] sm:$0xff] %vm34, %v37
  %40 = vst.msk [vmem:[#allocation2 + $0x1b] sm:$0xff] %vm34, %v38
  %s41 = scalar_lea.vmem [#allocation2], 1
  %v42 = vld [vmem:[%s41] ss:$2 sm:$0xff]
  %s43 = scalar_lea.vmem [#allocation2], 19
  %v44 = vld [vmem:[%s43] ss:$2 sm:$0xff]
  %v45 = vld [vmem:[#allocation2] ss:$2 sm:$0xff]
  %s46 = scalar_lea.vmem [#allocation2], 18
  %v47 = vld [vmem:[%s46] ss:$2 sm:$0xff]
  %v48 = vld [vmem:[%s1] sm:$0xff]
  %v49 = vld [vmem:[%s1 + $0x8] sm:$0xff]
  %v50 = vld [vmem:[%s1 + $0x10] sm:$0xff]
  %v51 = vld [vmem:[%s1 + $0x18] sm:$0xff]
  %v52 = vld [vmem:[%s1 + $0x20] sm:$0xff]
  %v53 = vld [vmem:[%s1 + $0x28] sm:$0xff]
  %v54 = vld [vmem:[%s1 + $0x30] sm:$0xff]
  %v55 = vld [vmem:[%s1 + $0x38] sm:$0xff]
  %s56 = scalar_lea.vmem %s1, 64
  %v57 = vld [vmem:[%s56] sm:$0xff]
  %v58 = vld [vmem:[%s56 + $0x8] sm:$0xff]
  %v59 = vld [vmem:[%s56 + $0x10] sm:$0xff]
  %v60 = vld [vmem:[%s56 + $0x18] sm:$0xff]
  %v61 = vld [vmem:[%s56 + $0x20] sm:$0xff]
  %v62 = vld [vmem:[%s56 + $0x28] sm:$0xff]
  %v63 = vld [vmem:[%s56 + $0x30] sm:$0xff]
  %v64 = vld [vmem:[%s56 + $0x38] sm:$0xff]
  %v66 = vsel %vm34, %v42, 0
  %v69 = vsel %vm34, %v44, 0
  %71 = vmatprep.subr.mxu0 0.0
  %72 = vmatpush1.msra.mxu0 0.0
  %73 = vmatprep.subr.mxu0 0.0
  %74 = vmatpush1.msra.mxu0 0.0
  %75 = vmatprep.subr.mxu0 0.0
  %76 = vmatpush1.msra.mxu0 0.0
  %77 = vmatprep.subr.mxu0 0.0
  %78 = vmatpush1.msra.mxu0 0.0
  %79 = vmatprep.subr.mxu0 0.0
  %80 = vmatpush1.msra.mxu0 0.0
  %81 = vmatprep.subr.mxu0 0.0
  %82 = vmatpush1.msra.mxu0 0.0
  %83 = vmatprep.subr.mxu0 0.0
  %84 = vmatpush1.msra.mxu0 0.0
  %85 = vmatprep.subr.mxu0 0.0
  %86 = vmatpush1.msra.mxu0 0.0
  %87 = vmatprep.subr.mxu0 0.0
  %88 = vmatpush1.msra.mxu0 %v64
  %89 = vmatprep.subr.mxu0 0.0
  %90 = vmatpush1.msra.mxu0 %v63
  %91 = vmatprep.subr.mxu0 0.0
  %92 = vmatpush1.msra.mxu0 %v62
  %93 = vmatprep.subr.mxu0 0.0
  %94 = vmatpush1.msra.mxu0 %v61
  %95 = vmatprep.subr.mxu0 0.0
  %96 = vmatpush1.msra.mxu0 %v60
  %97 = vmatprep.subr.mxu0 0.0
  %98 = vmatpush1.msra.mxu0 %v59
  %99 = vmatprep.subr.mxu0 0.0
  %100 = vmatpush1.msra.mxu0 %v58
  %101 = vmatprep.subr.mxu0 0.0
  %102 = vmatpush1.msra.mxu0 %v57
  %103 = vmatprep.subr.mxu0 0.0
  %104 = vmatpush2.msra.mxu0 0.0
  %105 = vmatprep.subr.mxu0 0.0
  %106 = vmatpush2.msra.mxu0 0.0
  %107 = vmatprep.subr.mxu0 0.0
  %108 = vmatpush2.msra.mxu0 0.0
  %109 = vmatprep.subr.mxu0 0.0
  %110 = vmatpush2.msra.mxu0 0.0
  %111 = vmatprep.subr.mxu0 0.0
  %112 = vmatpush2.msra.mxu0 0.0
  %113 = vmatprep.subr.mxu0 0.0
  %114 = vmatpush2.msra.mxu0 0.0
  %115 = vmatprep.subr.mxu0 0.0
  %116 = vmatpush2.msra.mxu0 0.0
  %117 = vmatprep.subr.mxu0 0.0
  %118 = vmatpush2.msra.mxu0 0.0
  %119 = vmatprep.subr.mxu0 0.0
  %120 = vmatpush2.msra.mxu0 0.0
  %121 = vmatprep.subr.mxu0 0.0
  %122 = vmatpush2.msra.mxu0 0.0
  %123 = vmatprep.subr.mxu0 0.0
  %124 = vmatpush2.msra.mxu0 0.0
  %125 = vmatprep.subr.mxu0 0.0
  %126 = vmatpush2.msra.mxu0 0.0
  %127 = vmatprep.subr.mxu0 0.0
  %128 = vmatpush2.msra.mxu0 0.0
  %129 = vmatprep.subr.mxu0 0.0
  %130 = vmatpush2.msra.mxu0 0.0
  %131 = vmatprep.subr.mxu0 0.0
  %132 = vmatpush2.msra.mxu0 0.0
  %133 = vmatprep.subr.mxu0 0.0
  %134 = vmatpush2.msra.mxu0 0.0
  %135 = vmatprep.mubr.f32.mxu0 0.0
  %136 = vmatmul.mubr.f32.gmra.mxu0 %v66
  %v137 = vpop.f32.mrf.mxu0
  %v138 = vadd.f32 0.0, %v137
  %v139 = vpop.f32.mrf.mxu0
  %140 = vmatprep.mubr.f32.mxu0 0.0
  %141 = vmatmul.mubr.f32.gmra.mxu0 %v69
  %v142 = vpop.f32.mrf.mxu0
  %v143 = vadd.f32 0.0, %v142
  %v144 = vpop.f32.mrf.mxu0
  %145 = vdwg.mxu0
  %v147 = vsel %vm34, %v45, 0
  %v150 = vsel %vm34, %v47, 0
  %152 = vmatprep.subr.mxu0 0.0
  %153 = vmatpush1.msra.mxu0 0.0
  %154 = vmatprep.subr.mxu0 0.0
  %155 = vmatpush1.msra.mxu0 0.0
  %156 = vmatprep.subr.mxu0 0.0
  %157 = vmatpush1.msra.mxu0 0.0
  %158 = vmatprep.subr.mxu0 0.0
  %159 = vmatpush1.msra.mxu0 0.0
  %160 = vmatprep.subr.mxu0 0.0
  %161 = vmatpush1.msra.mxu0 0.0
  %162 = vmatprep.subr.mxu0 0.0
  %163 = vmatpush1.msra.mxu0 0.0
  %164 = vmatprep.subr.mxu0 0.0
  %165 = vmatpush1.msra.mxu0 0.0
  %166 = vmatprep.subr.mxu0 0.0
  %167 = vmatpush1.msra.mxu0 0.0
  %168 = vmatprep.subr.mxu0 0.0
  %169 = vmatpush1.msra.mxu0 %v55
  %170 = vmatprep.subr.mxu0 0.0
  %171 = vmatpush1.msra.mxu0 %v54
  %172 = vmatprep.subr.mxu0 0.0
  %173 = vmatpush1.msra.mxu0 %v53
  %174 = vmatprep.subr.mxu0 0.0
  %175 = vmatpush1.msra.mxu0 %v52
  %176 = vmatprep.subr.mxu0 0.0
  %177 = vmatpush1.msra.mxu0 %v51
  %178 = vmatprep.subr.mxu0 0.0
  %179 = vmatpush1.msra.mxu0 %v50
  %180 = vmatprep.subr.mxu0 0.0
  %181 = vmatpush1.msra.mxu0 %v49
  %182 = vmatprep.subr.mxu0 0.0
  %183 = vmatpush1.msra.mxu0 %v48
  %184 = vmatprep.subr.mxu0 0.0
  %185 = vmatpush2.msra.mxu0 0.0
  %186 = vmatprep.subr.mxu0 0.0
  %187 = vmatpush2.msra.mxu0 0.0
  %188 = vmatprep.subr.mxu0 0.0
  %189 = vmatpush2.msra.mxu0 0.0
  %190 = vmatprep.subr.mxu0 0.0
  %191 = vmatpush2.msra.mxu0 0.0
  %192 = vmatprep.subr.mxu0 0.0
  %193 = vmatpush2.msra.mxu0 0.0
  %194 = vmatprep.subr.mxu0 0.0
  %195 = vmatpush2.msra.mxu0 0.0
  %196 = vmatprep.subr.mxu0 0.0
  %197 = vmatpush2.msra.mxu0 0.0
  %198 = vmatprep.subr.mxu0 0.0
  %199 = vmatpush2.msra.mxu0 0.0
  %200 = vmatprep.subr.mxu0 0.0
  %201 = vmatpush2.msra.mxu0 0.0
  %202 = vmatprep.subr.mxu0 0.0
  %203 = vmatpush2.msra.mxu0 0.0
  %204 = vmatprep.subr.mxu0 0.0
  %205 = vmatpush2.msra.mxu0 0.0
  %206 = vmatprep.subr.mxu0 0.0
  %207 = vmatpush2.msra.mxu0 0.0
  %208 = vmatprep.subr.mxu0 0.0
  %209 = vmatpush2.msra.mxu0 0.0
  %210 = vmatprep.subr.mxu0 0.0
  %211 = vmatpush2.msra.mxu0 0.0
  %212 = vmatprep.subr.mxu0 0.0
  %213 = vmatpush2.msra.mxu0 0.0
  %214 = vmatprep.subr.mxu0 0.0
  %215 = vmatpush2.msra.mxu0 0.0
  %216 = vmatprep.mubr.f32.mxu0 0.0
  %217 = vmatmul.mubr.f32.gmra.mxu0 %v147
  %v218 = vpop.f32.mrf.mxu0
  %v219 = vadd.f32 %v138, %v218
  %v220 = vpop.f32.mrf.mxu0
  %221 = vmatprep.mubr.f32.mxu0 0.0
  %222 = vmatmul.mubr.f32.gmra.mxu0 %v150
  %v223 = vpop.f32.mrf.mxu0
  %v224 = vadd.f32 %v143, %v223
  %v225 = vpop.f32.mrf.mxu0
  %226 = vdwg.mxu0
  %s227 = scalar_lea.vmem [#allocation2], 2
  %v228 = vld [vmem:[%s227] ss:$2 sm:$0xff]
  %s229 = scalar_lea.vmem [#allocation2], 20
  %v230 = vld [vmem:[%s229] ss:$2 sm:$0xff]
  %s231 = scalar_lea.vmem %s1, 128
  %v232 = vld [vmem:[%s231] sm:$0xff]
  %v233 = vld [vmem:[%s231 + $0x8] sm:$0xff]
  %v234 = vld [vmem:[%s231 + $0x10] sm:$0xff]
  %v235 = vld [vmem:[%s231 + $0x18] sm:$0xff]
  %v236 = vld [vmem:[%s231 + $0x20] sm:$0xff]
  %v237 = vld [vmem:[%s231 + $0x28] sm:$0xff]
  %v238 = vld [vmem:[%s231 + $0x30] sm:$0xff]
  %v239 = vld [vmem:[%s231 + $0x38] sm:$0xff]
  %v241 = vsel %vm34, %v228, 0
  %v244 = vsel %vm34, %v230, 0
  %246 = vmatprep.subr.mxu0 0.0
  %247 = vmatpush1.msra.mxu0 0.0
  %248 = vmatprep.subr.mxu0 0.0
  %249 = vmatpush1.msra.mxu0 0.0
  %250 = vmatprep.subr.mxu0 0.0
  %251 = vmatpush1.msra.mxu0 0.0
  %252 = vmatprep.subr.mxu0 0.0
  %253 = vmatpush1.msra.mxu0 0.0
  %254 = vmatprep.subr.mxu0 0.0
  %255 = vmatpush1.msra.mxu0 0.0
  %256 = vmatprep.subr.mxu0 0.0
  %257 = vmatpush1.msra.mxu0 0.0
  %258 = vmatprep.subr.mxu0 0.0
  %259 = vmatpush1.msra.mxu0 0.0
  %260 = vmatprep.subr.mxu0 0.0
  %261 = vmatpush1.msra.mxu0 0.0
  %262 = vmatprep.subr.mxu0 0.0
  %263 = vmatpush1.msra.mxu0 %v239
  %264 = vmatprep.subr.mxu0 0.0
  %265 = vmatpush1.msra.mxu0 %v238
  %266 = vmatprep.subr.mxu0 0.0
  %267 = vmatpush1.msra.mxu0 %v237
  %268 = vmatprep.subr.mxu0 0.0
  %269 = vmatpush1.msra.mxu0 %v236
  %270 = vmatprep.subr.mxu0 0.0
  %271 = vmatpush1.msra.mxu0 %v235
  %272 = vmatprep.subr.mxu0 0.0
  %273 = vmatpush1.msra.mxu0 %v234
  %274 = vmatprep.subr.mxu0 0.0
  %275 = vmatpush1.msra.mxu0 %v233
  %276 = vmatprep.subr.mxu0 0.0
  %277 = vmatpush1.msra.mxu0 %v232
  %278 = vmatprep.subr.mxu0 0.0
  %279 = vmatpush2.msra.mxu0 0.0
  %280 = vmatprep.subr.mxu0 0.0
  %281 = vmatpush2.msra.mxu0 0.0
  %282 = vmatprep.subr.mxu0 0.0
  %283 = vmatpush2.msra.mxu0 0.0
  %284 = vmatprep.subr.mxu0 0.0
  %285 = vmatpush2.msra.mxu0 0.0
  %286 = vmatprep.subr.mxu0 0.0
  %287 = vmatpush2.msra.mxu0 0.0
  %288 = vmatprep.subr.mxu0 0.0
  %289 = vmatpush2.msra.mxu0 0.0
  %290 = vmatprep.subr.mxu0 0.0
  %291 = vmatpush2.msra.mxu0 0.0
  %292 = vmatprep.subr.mxu0 0.0
  %293 = vmatpush2.msra.mxu0 0.0
  %294 = vmatprep.subr.mxu0 0.0
  %295 = vmatpush2.msra.mxu0 0.0
  %296 = vmatprep.subr.mxu0 0.0
  %297 = vmatpush2.msra.mxu0 0.0
  %298 = vmatprep.subr.mxu0 0.0
  %299 = vmatpush2.msra.mxu0 0.0
  %300 = vmatprep.subr.mxu0 0.0
  %301 = vmatpush2.msra.mxu0 0.0
  %302 = vmatprep.subr.mxu0 0.0
  %303 = vmatpush2.msra.mxu0 0.0
  %304 = vmatprep.subr.mxu0 0.0
  %305 = vmatpush2.msra.mxu0 0.0
  %306 = vmatprep.subr.mxu0 0.0
  %307 = vmatpush2.msra.mxu0 0.0
  %308 = vmatprep.subr.mxu0 0.0
  %309 = vmatpush2.msra.mxu0 0.0
  %310 = vmatprep.mubr.f32.mxu0 0.0
  %311 = vmatmul.mubr.f32.gmra.mxu0 %v241
  %v312 = vpop.f32.mrf.mxu0
  %v313 = vadd.f32 0.0, %v312
  %v314 = vpop.f32.mrf.mxu0
  %315 = vmatprep.mubr.f32.mxu0 0.0
  %316 = vmatmul.mubr.f32.gmra.mxu0 %v244
  %v317 = vpop.f32.mrf.mxu0
  %v318 = vadd.f32 0.0, %v317
  %v319 = vpop.f32.mrf.mxu0
  %320 = vdwg.mxu0
  %v321 = vadd.f32 %v219, %v313
  %v322 = vadd.f32 %v224, %v318
  %v323 = vld [vmem:[%s2] sm:$0x1]
  %v325 = vlaneseq
  %v326 = vshrl.u32 %v325, 7
  %v327 = vsub.s32 0, %v326
  %v328 = vrot.slane %v323, %v327
  %v330 = vadd.f32 %v321, %v328
  %v331 = vadd.f32 %v322, %v328
  %v332 = vmax.f32 %v330, 0.0
  %v333 = vmax.f32 %v331, 0.0
  %v334 = vand.u32 2147483647, %v330
  %v335 = vand.u32 2147483647, %v331
  %v336 = vsub.f32 0.0, %v334
  %v337 = vsub.f32 0.0, %v335
  %v338 = vmul.f32 %v336, 1.442695
  %v339 = vpow.pop %v338
  %v340 = vmul.f32 %v337, 1.442695
  %v341 = vpow.pop %v340
  %v342 = vadd.f32 %v339, 1.0
  %v343 = vadd.f32 %v341, 1.0
  %v344 = vlog2.pop %v342
  %v345 = vmul.f32 %v344, 0.6931472
  %v346 = vlog2.pop %v343
  %v347 = vmul.f32 %v346, 0.6931472
  %v348 = vadd.f32 %v332, %v345
  %v349 = vadd.f32 %v333, %v347
  %v350 = vld [vmem:[%s5] sm:$0xff]
  %v351 = vld [vmem:[%s5 + $0x8] sm:$0xff]
  %v352 = vld [vmem:[%s5 + $0x10] sm:$0xff]
  %v353 = vld [vmem:[%s5 + $0x18] sm:$0xff]
  %v354 = vld [vmem:[%s5 + $0x20] sm:$0xff]
  %v355 = vld [vmem:[%s5 + $0x28] sm:$0xff]
  %v356 = vld [vmem:[%s5 + $0x30] sm:$0xff]
  %v357 = vld [vmem:[%s5 + $0x38] sm:$0xff]
  %358 = vst.msk [vmem:[#allocation3 + $0x1] sm:$0xff] %vm34, %v348
  %359 = vst.msk [vmem:[#allocation3 + $0xb] sm:$0xff] %vm34, %v349
  %v360 = vld [vmem:[#allocation3] sm:$0xff]
  %v361 = vld [vmem:[#allocation3 + $0xa] sm:$0xff]
  %v362 = vld [vmem:[%s3] sm:$0xff]
  %v363 = vld [vmem:[%s3 + $0x8] sm:$0xff]
  %v364 = vld [vmem:[%s3 + $0x10] sm:$0xff]
  %v365 = vld [vmem:[%s3 + $0x18] sm:$0xff]
  %v366 = vld [vmem:[%s3 + $0x20] sm:$0xff]
  %v367 = vld [vmem:[%s3 + $0x28] sm:$0xff]
  %v368 = vld [vmem:[%s3 + $0x30] sm:$0xff]
  %v369 = vld [vmem:[%s3 + $0x38] sm:$0xff]
  %v371 = vsel %vm34, %v360, 0
  %v374 = vsel %vm34, %v361, 0
  %376 = vmatprep.subr.mxu0 0.0
  %377 = vmatpush1.msra.mxu0 0.0
  %378 = vmatprep.subr.mxu0 0.0
  %379 = vmatpush1.msra.mxu0 0.0
  %380 = vmatprep.subr.mxu0 0.0
  %381 = vmatpush1.msra.mxu0 0.0
  %382 = vmatprep.subr.mxu0 0.0
  %383 = vmatpush1.msra.mxu0 0.0
  %384 = vmatprep.subr.mxu0 0.0
  %385 = vmatpush1.msra.mxu0 0.0
  %386 = vmatprep.subr.mxu0 0.0
  %387 = vmatpush1.msra.mxu0 0.0
  %388 = vmatprep.subr.mxu0 0.0
  %389 = vmatpush1.msra.mxu0 0.0
  %390 = vmatprep.subr.mxu0 0.0
  %391 = vmatpush1.msra.mxu0 0.0
  %392 = vmatprep.subr.mxu0 0.0
  %393 = vmatpush1.msra.mxu0 %v369
  %394 = vmatprep.subr.mxu0 0.0
  %395 = vmatpush1.msra.mxu0 %v368
  %396 = vmatprep.subr.mxu0 0.0
  %397 = vmatpush1.msra.mxu0 %v367
  %398 = vmatprep.subr.mxu0 0.0
  %399 = vmatpush1.msra.mxu0 %v366
  %400 = vmatprep.subr.mxu0 0.0
  %401 = vmatpush1.msra.mxu0 %v365
  %402 = vmatprep.subr.mxu0 0.0
  %403 = vmatpush1.msra.mxu0 %v364
  %404 = vmatprep.subr.mxu0 0.0
  %405 = vmatpush1.msra.mxu0 %v363
  %406 = vmatprep.subr.mxu0 0.0
  %407 = vmatpush1.msra.mxu0 %v362
  %408 = vmatprep.subr.mxu0 0.0
  %409 = vmatpush2.msra.mxu0 0.0
  %410 = vmatprep.subr.mxu0 0.0
  %411 = vmatpush2.msra.mxu0 0.0
  %412 = vmatprep.subr.mxu0 0.0
  %413 = vmatpush2.msra.mxu0 0.0
  %414 = vmatprep.subr.mxu0 0.0
  %415 = vmatpush2.msra.mxu0 0.0
  %416 = vmatprep.subr.mxu0 0.0
  %417 = vmatpush2.msra.mxu0 0.0
  %418 = vmatprep.subr.mxu0 0.0
  %419 = vmatpush2.msra.mxu0 0.0
  %420 = vmatprep.subr.mxu0 0.0
  %421 = vmatpush2.msra.mxu0 0.0
  %422 = vmatprep.subr.mxu0 0.0
  %423 = vmatpush2.msra.mxu0 0.0
  %424 = vmatprep.subr.mxu0 0.0
  %425 = vmatpush2.msra.mxu0 0.0
  %426 = vmatprep.subr.mxu0 0.0
  %427 = vmatpush2.msra.mxu0 0.0
  %428 = vmatprep.subr.mxu0 0.0
  %429 = vmatpush2.msra.mxu0 0.0
  %430 = vmatprep.subr.mxu0 0.0
  %431 = vmatpush2.msra.mxu0 0.0
  %432 = vmatprep.subr.mxu0 0.0
  %433 = vmatpush2.msra.mxu0 0.0
  %434 = vmatprep.subr.mxu0 0.0
  %435 = vmatpush2.msra.mxu0 0.0
  %436 = vmatprep.subr.mxu0 0.0
  %437 = vmatpush2.msra.mxu0 0.0
  %438 = vmatprep.subr.mxu0 0.0
  %439 = vmatpush2.msra.mxu0 0.0
  %440 = vmatprep.mubr.f32.mxu0 0.0
  %441 = vmatmul.mubr.f32.gmra.mxu0 %v371
  %v442 = vpop.f32.mrf.mxu0
  %v443 = vadd.f32 0.0, %v442
  %v444 = vpop.f32.mrf.mxu0
  %445 = vmatprep.mubr.f32.mxu0 0.0
  %446 = vmatmul.mubr.f32.gmra.mxu0 %v374
  %v447 = vpop.f32.mrf.mxu0
  %v448 = vadd.f32 0.0, %v447
  %v449 = vpop.f32.mrf.mxu0
  %450 = vdwg.mxu0
  %451 = vmatprep.subr.mxu0 0.0
  %452 = vmatpush1.msra.mxu0 0.0
  %453 = vmatprep.subr.mxu0 0.0
  %454 = vmatpush1.msra.mxu0 0.0
  %455 = vmatprep.subr.mxu0 0.0
  %456 = vmatpush1.msra.mxu0 0.0
  %457 = vmatprep.subr.mxu0 0.0
  %458 = vmatpush1.msra.mxu0 0.0
  %459 = vmatprep.subr.mxu0 0.0
  %460 = vmatpush1.msra.mxu0 0.0
  %461 = vmatprep.subr.mxu0 0.0
  %462 = vmatpush1.msra.mxu0 0.0
  %463 = vmatprep.subr.mxu0 0.0
  %464 = vmatpush1.msra.mxu0 0.0
  %465 = vmatprep.subr.mxu0 0.0
  %466 = vmatpush1.msra.mxu0 0.0
  %467 = vmatprep.subr.mxu0 0.0
  %468 = vmatpush1.msra.mxu0 %v357
  %469 = vmatprep.subr.mxu0 0.0
  %470 = vmatpush1.msra.mxu0 %v356
  %471 = vmatprep.subr.mxu0 0.0
  %472 = vmatpush1.msra.mxu0 %v355
  %473 = vmatprep.subr.mxu0 0.0
  %474 = vmatpush1.msra.mxu0 %v354
  %475 = vmatprep.subr.mxu0 0.0
  %476 = vmatpush1.msra.mxu0 %v353
  %477 = vmatprep.subr.mxu0 0.0
  %478 = vmatpush1.msra.mxu0 %v352
  %479 = vmatprep.subr.mxu0 0.0
  %480 = vmatpush1.msra.mxu0 %v351
  %481 = vmatprep.subr.mxu0 0.0
  %482 = vmatpush1.msra.mxu0 %v350
  %483 = vmatprep.subr.mxu0 0.0
  %484 = vmatpush2.msra.mxu0 0.0
  %485 = vmatprep.subr.mxu0 0.0
  %486 = vmatpush2.msra.mxu0 0.0
  %487 = vmatprep.subr.mxu0 0.0
  %488 = vmatpush2.msra.mxu0 0.0
  %489 = vmatprep.subr.mxu0 0.0
  %490 = vmatpush2.msra.mxu0 0.0
  %491 = vmatprep.subr.mxu0 0.0
  %492 = vmatpush2.msra.mxu0 0.0
  %493 = vmatprep.subr.mxu0 0.0
  %494 = vmatpush2.msra.mxu0 0.0
  %495 = vmatprep.subr.mxu0 0.0
  %496 = vmatpush2.msra.mxu0 0.0
  %497 = vmatprep.subr.mxu0 0.0
  %498 = vmatpush2.msra.mxu0 0.0
  %499 = vmatprep.subr.mxu0 0.0
  %500 = vmatpush2.msra.mxu0 0.0
  %501 = vmatprep.subr.mxu0 0.0
  %502 = vmatpush2.msra.mxu0 0.0
  %503 = vmatprep.subr.mxu0 0.0
  %504 = vmatpush2.msra.mxu0 0.0
  %505 = vmatprep.subr.mxu0 0.0
  %506 = vmatpush2.msra.mxu0 0.0
  %507 = vmatprep.subr.mxu0 0.0
  %508 = vmatpush2.msra.mxu0 0.0
  %509 = vmatprep.subr.mxu0 0.0
  %510 = vmatpush2.msra.mxu0 0.0
  %511 = vmatprep.subr.mxu0 0.0
  %512 = vmatpush2.msra.mxu0 0.0
  %513 = vmatprep.subr.mxu0 0.0
  %514 = vmatpush2.msra.mxu0 0.0
  %515 = vmatprep.mubr.f32.mxu0 0.0
  %516 = vmatmul.mubr.f32.gmra.mxu0 %v66
  %v517 = vpop.f32.mrf.mxu0
  %v518 = vadd.f32 %v443, %v517
  %v519 = vpop.f32.mrf.mxu0
  %520 = vmatprep.mubr.f32.mxu0 0.0
  %521 = vmatmul.mubr.f32.gmra.mxu0 %v69
  %v522 = vpop.f32.mrf.mxu0
  %v523 = vadd.f32 %v448, %v522
  %v524 = vpop.f32.mrf.mxu0
  %525 = vdwg.mxu0
  %v526 = vld [vmem:[#allocation3 + $0x1] sm:$0xff]
  %v527 = vld [vmem:[#allocation3 + $0xb] sm:$0xff]
  %s528 = scalar_lea.vmem %s3, 64
  %v529 = vld [vmem:[%s528] sm:$0xff]
  %v530 = vld [vmem:[%s528 + $0x8] sm:$0xff]
  %v531 = vld [vmem:[%s528 + $0x10] sm:$0xff]
  %v532 = vld [vmem:[%s528 + $0x18] sm:$0xff]
  %v533 = vld [vmem:[%s528 + $0x20] sm:$0xff]
  %v534 = vld [vmem:[%s528 + $0x28] sm:$0xff]
  %v535 = vld [vmem:[%s528 + $0x30] sm:$0xff]
  %v536 = vld [vmem:[%s528 + $0x38] sm:$0xff]
  %v538 = vsel %vm34, %v526, 0
  %v541 = vsel %vm34, %v527, 0
  %543 = vmatprep.subr.mxu0 0.0
  %544 = vmatpush1.msra.mxu0 0.0
  %545 = vmatprep.subr.mxu0 0.0
  %546 = vmatpush1.msra.mxu0 0.0
  %547 = vmatprep.subr.mxu0 0.0
  %548 = vmatpush1.msra.mxu0 0.0
  %549 = vmatprep.subr.mxu0 0.0
  %550 = vmatpush1.msra.mxu0 0.0
  %551 = vmatprep.subr.mxu0 0.0
  %552 = vmatpush1.msra.mxu0 0.0
  %553 = vmatprep.subr.mxu0 0.0
  %554 = vmatpush1.msra.mxu0 0.0
  %555 = vmatprep.subr.mxu0 0.0
  %556 = vmatpush1.msra.mxu0 0.0
  %557 = vmatprep.subr.mxu0 0.0
  %558 = vmatpush1.msra.mxu0 0.0
  %559 = vmatprep.subr.mxu0 0.0
  %560 = vmatpush1.msra.mxu0 %v536
  %561 = vmatprep.subr.mxu0 0.0
  %562 = vmatpush1.msra.mxu0 %v535
  %563 = vmatprep.subr.mxu0 0.0
  %564 = vmatpush1.msra.mxu0 %v534
  %565 = vmatprep.subr.mxu0 0.0
  %566 = vmatpush1.msra.mxu0 %v533
  %567 = vmatprep.subr.mxu0 0.0
  %568 = vmatpush1.msra.mxu0 %v532
  %569 = vmatprep.subr.mxu0 0.0
  %570 = vmatpush1.msra.mxu0 %v531
  %571 = vmatprep.subr.mxu0 0.0
  %572 = vmatpush1.msra.mxu0 %v530
  %573 = vmatprep.subr.mxu0 0.0
  %574 = vmatpush1.msra.mxu0 %v529
  %575 = vmatprep.subr.mxu0 0.0
  %576 = vmatpush2.msra.mxu0 0.0
  %577 = vmatprep.subr.mxu0 0.0
  %578 = vmatpush2.msra.mxu0 0.0
  %579 = vmatprep.subr.mxu0 0.0
  %580 = vmatpush2.msra.mxu0 0.0
  %581 = vmatprep.subr.mxu0 0.0
  %582 = vmatpush2.msra.mxu0 0.0
  %583 = vmatprep.subr.mxu0 0.0
  %584 = vmatpush2.msra.mxu0 0.0
  %585 = vmatprep.subr.mxu0 0.0
  %586 = vmatpush2.msra.mxu0 0.0
  %587 = vmatprep.subr.mxu0 0.0
  %588 = vmatpush2.msra.mxu0 0.0
  %589 = vmatprep.subr.mxu0 0.0
  %590 = vmatpush2.msra.mxu0 0.0
  %591 = vmatprep.subr.mxu0 0.0
  %592 = vmatpush2.msra.mxu0 0.0
  %593 = vmatprep.subr.mxu0 0.0
  %594 = vmatpush2.msra.mxu0 0.0
  %595 = vmatprep.subr.mxu0 0.0
  %596 = vmatpush2.msra.mxu0 0.0
  %597 = vmatprep.subr.mxu0 0.0
  %598 = vmatpush2.msra.mxu0 0.0
  %599 = vmatprep.subr.mxu0 0.0
  %600 = vmatpush2.msra.mxu0 0.0
  %601 = vmatprep.subr.mxu0 0.0
  %602 = vmatpush2.msra.mxu0 0.0
  %603 = vmatprep.subr.mxu0 0.0
  %604 = vmatpush2.msra.mxu0 0.0
  %605 = vmatprep.subr.mxu0 0.0
  %606 = vmatpush2.msra.mxu0 0.0
  %607 = vmatprep.mubr.f32.mxu0 0.0
  %608 = vmatmul.mubr.f32.gmra.mxu0 %v538
  %v609 = vpop.f32.mrf.mxu0
  %v610 = vadd.f32 0.0, %v609
  %v611 = vpop.f32.mrf.mxu0
  %612 = vmatprep.mubr.f32.mxu0 0.0
  %613 = vmatmul.mubr.f32.gmra.mxu0 %v541
  %v614 = vpop.f32.mrf.mxu0
  %v615 = vadd.f32 0.0, %v614
  %v616 = vpop.f32.mrf.mxu0
  %617 = vdwg.mxu0
  %v618 = vadd.f32 %v518, %v610
  %v619 = vadd.f32 %v523, %v615
  %v620 = vld [vmem:[#allocation3 + $0x2] sm:$0xff]
  %v621 = vld [vmem:[#allocation3 + $0xc] sm:$0xff]
  %s622 = scalar_lea.vmem %s3, 128
  %v623 = vld [vmem:[%s622] sm:$0xff]
  %v624 = vld [vmem:[%s622 + $0x8] sm:$0xff]
  %v625 = vld [vmem:[%s622 + $0x10] sm:$0xff]
  %v626 = vld [vmem:[%s622 + $0x18] sm:$0xff]
  %v627 = vld [vmem:[%s622 + $0x20] sm:$0xff]
  %v628 = vld [vmem:[%s622 + $0x28] sm:$0xff]
  %v629 = vld [vmem:[%s622 + $0x30] sm:$0xff]
  %v630 = vld [vmem:[%s622 + $0x38] sm:$0xff]
  %v632 = vsel %vm34, %v620, 0
  %v635 = vsel %vm34, %v621, 0
  %637 = vmatprep.subr.mxu0 0.0
  %638 = vmatpush1.msra.mxu0 0.0
  %639 = vmatprep.subr.mxu0 0.0
  %640 = vmatpush1.msra.mxu0 0.0
  %641 = vmatprep.subr.mxu0 0.0
  %642 = vmatpush1.msra.mxu0 0.0
  %643 = vmatprep.subr.mxu0 0.0
  %644 = vmatpush1.msra.mxu0 0.0
  %645 = vmatprep.subr.mxu0 0.0
  %646 = vmatpush1.msra.mxu0 0.0
  %647 = vmatprep.subr.mxu0 0.0
  %648 = vmatpush1.msra.mxu0 0.0
  %649 = vmatprep.subr.mxu0 0.0
  %650 = vmatpush1.msra.mxu0 0.0
  %651 = vmatprep.subr.mxu0 0.0
  %652 = vmatpush1.msra.mxu0 0.0
  %653 = vmatprep.subr.mxu0 0.0
  %654 = vmatpush1.msra.mxu0 %v630
  %655 = vmatprep.subr.mxu0 0.0
  %656 = vmatpush1.msra.mxu0 %v629
  %657 = vmatprep.subr.mxu0 0.0
  %658 = vmatpush1.msra.mxu0 %v628
  %659 = vmatprep.subr.mxu0 0.0
  %660 = vmatpush1.msra.mxu0 %v627
  %661 = vmatprep.subr.mxu0 0.0
  %662 = vmatpush1.msra.mxu0 %v626
  %663 = vmatprep.subr.mxu0 0.0
  %664 = vmatpush1.msra.mxu0 %v625
  %665 = vmatprep.subr.mxu0 0.0
  %666 = vmatpush1.msra.mxu0 %v624
  %667 = vmatprep.subr.mxu0 0.0
  %668 = vmatpush1.msra.mxu0 %v623
  %669 = vmatprep.subr.mxu0 0.0
  %670 = vmatpush2.msra.mxu0 0.0
  %671 = vmatprep.subr.mxu0 0.0
  %672 = vmatpush2.msra.mxu0 0.0
  %673 = vmatprep.subr.mxu0 0.0
  %674 = vmatpush2.msra.mxu0 0.0
  %675 = vmatprep.subr.mxu0 0.0
  %676 = vmatpush2.msra.mxu0 0.0
  %677 = vmatprep.subr.mxu0 0.0
  %678 = vmatpush2.msra.mxu0 0.0
  %679 = vmatprep.subr.mxu0 0.0
  %680 = vmatpush2.msra.mxu0 0.0
  %681 = vmatprep.subr.mxu0 0.0
  %682 = vmatpush2.msra.mxu0 0.0
  %683 = vmatprep.subr.mxu0 0.0
  %684 = vmatpush2.msra.mxu0 0.0
  %685 = vmatprep.subr.mxu0 0.0
  %686 = vmatpush2.msra.mxu0 0.0
  %687 = vmatprep.subr.mxu0 0.0
  %688 = vmatpush2.msra.mxu0 0.0
  %689 = vmatprep.subr.mxu0 0.0
  %690 = vmatpush2.msra.mxu0 0.0
  %691 = vmatprep.subr.mxu0 0.0
  %692 = vmatpush2.msra.mxu0 0.0
  %693 = vmatprep.subr.mxu0 0.0
  %694 = vmatpush2.msra.mxu0 0.0
  %695 = vmatprep.subr.mxu0 0.0
  %696 = vmatpush2.msra.mxu0 0.0
  %697 = vmatprep.subr.mxu0 0.0
  %698 = vmatpush2.msra.mxu0 0.0
  %699 = vmatprep.subr.mxu0 0.0
  %700 = vmatpush2.msra.mxu0 0.0
  %701 = vmatprep.mubr.f32.mxu0 0.0
  %702 = vmatmul.mubr.f32.gmra.mxu0 %v632
  %v703 = vpop.f32.mrf.mxu0
  %v704 = vadd.f32 0.0, %v703
  %v705 = vpop.f32.mrf.mxu0
  %706 = vmatprep.mubr.f32.mxu0 0.0
  %707 = vmatmul.mubr.f32.gmra.mxu0 %v635
  %v708 = vpop.f32.mrf.mxu0
  %v709 = vadd.f32 0.0, %v708
  %v710 = vpop.f32.mrf.mxu0
  %711 = vdwg.mxu0
  %v712 = vadd.f32 %v618, %v704
  %v713 = vadd.f32 %v619, %v709
  %v714 = vld [vmem:[%s4] sm:$0x1]
  %v716 = vlaneseq
  %v717 = vshrl.u32 %v716, 7
  %v718 = vsub.s32 0, %v717
  %v719 = vrot.slane %v714, %v718
  %v721 = vadd.f32 %v712, %v719
  %v722 = vadd.f32 %v713, %v719
  %v723 = vmax.f32 %v721, 0.0
  %v724 = vmax.f32 %v722, 0.0
  %v725 = vand.u32 2147483647, %v721
  %v726 = vand.u32 2147483647, %v722
  %v727 = vsub.f32 0.0, %v725
  %v728 = vsub.f32 0.0, %v726
  %v729 = vmul.f32 %v727, 1.442695
  %v730 = vpow.pop %v729
  %v731 = vmul.f32 %v728, 1.442695
  %v732 = vpow.pop %v731
  %v733 = vadd.f32 %v730, 1.0
  %v734 = vadd.f32 %v732, 1.0
  %v735 = vlog2.pop %v733
  %v736 = vmul.f32 %v735, 0.6931472
  %v737 = vlog2.pop %v734
  %v738 = vmul.f32 %v737, 0.6931472
  %v739 = vadd.f32 %v723, %v736
  %v740 = vadd.f32 %v724, %v738
  %741 = vst.msk [vmem:[%s6] sm:$0xff] %vm34, %v739
  %742 = vst.msk [vmem:[%s6 + $0x8] sm:$0xff] %vm34, %v740
  // Predicated region
  $region26: #{basic_block_forward.1} parent=0 // pred_check
    _
  $region27: #{basic_block_forward.1} parent=0 // pred_check_branch
    %744 = sbr.rel (0) target = $region29
  $region28: #{basic_block_forward.1} parent=0 // pred_region
    _
  $region29: #{basic_block_forward.1} parent=0 // pred_fallthru
    _
  // Predicated region
  $region30: #{basic_block_forward.1} parent=0 // pred_check
    _
  $region31: #{basic_block_forward.1} parent=0 // pred_check_branch
    %746 = sbr.rel (0) target = $region33
  $region32: #{basic_block_forward.1} parent=0 // pred_region
    _
  $region33: #{basic_block_forward.1} parent=0 // pred_fallthru
    _

</llo_original>
